<compile_context>
chip_gen: v5e
topology: v5e:2x2
jax: 0.10.0
libtpu: 0.0.40
codegen_flags: <defaults>
</compile_context>

<pallas_src>
import jax
import jax.numpy as jnp
from jax.experimental import pallas as pl
from jax.experimental.pallas import tpu as pltpu


# ----------------------------------------------------------------------------
# Kernel
# ----------------------------------------------------------------------------
def _make_kernel(S, TS):
    """Kernel closure; S, TS are trace-time constants (for ragged-S masking)."""
    rem = S % TS  # valid length of the last sequence tile (0 == no ragged tile)

    def kernel(x_ref, m_ref, o_ref, acc_ref, cnt_ref):
        # x_ref: (TB, TS, TE)   m_ref: (TB, TS)   o_ref: (TB, TE)
        # acc_ref: (TB, TE) f32 scratch   cnt_ref: (TB, 1) f32 scratch
        s_idx = pl.program_id(2)

        @pl.when(s_idx == 0)
        def _init():
            acc_ref[...] = jnp.zeros_like(acc_ref)
            cnt_ref[...] = jnp.zeros_like(cnt_ref)

        x = x_ref[...]
        if x.dtype != jnp.float32:          # trace-time branch: skip identity casts
            x = x.astype(jnp.float32)
        m = m_ref[...]
        if m.dtype != jnp.float32:
            m = m.astype(jnp.float32)

        if rem != 0:
            # Ragged final sequence tile: the out-of-bounds tail of this block
            # holds stale VMEM data -> zero it explicitly (both mask and input,
            # so NaN/Inf garbage cannot leak into the accumulator via 0 * NaN).
            num_s = pl.num_programs(2)
            limit = jnp.where(s_idx == num_s - 1, rem, TS)     # scalar int32
            lane_iota = jax.lax.broadcasted_iota(jnp.int32, (1, TS), 1)
            m = jnp.where(lane_iota < limit, m, 0.0)
            sub_iota = jax.lax.broadcasted_iota(jnp.int32, (1, TS, 1), 1)
            x = jnp.where(sub_iota < limit, x, 0.0)

        # Masked partial sums over this sequence tile.
        acc_ref[...] += jnp.sum(x * m[:, :, None], axis=1)        # (TB, TE)
        cnt_ref[...] += jnp.sum(m, axis=1, keepdims=True)         # (TB, 1)

        @pl.when(s_idx == pl.num_programs(2) - 1)
        def _finalize():
            cnt = cnt_ref[...]
            cnt = jnp.where(cnt == 0.0, 1.0, cnt)                 # clamp word_count >= 1
            inv = pl.reciprocal(cnt, approx=False)                # exact enough for 1e-5 tol
            o_ref[...] = (acc_ref[...] * inv).astype(o_ref.dtype)

    return kernel


# ----------------------------------------------------------------------------
# Tile selection
# ----------------------------------------------------------------------------
def _round_up(x, m):
    return -(-x // m) * m


def _sublane_multiple(itemsize):
    # sub-32-bit dtypes pack along sublanes -> larger sublane tile requirement
    return 8 * max(1, 4 // max(1, itemsize))


def _vmem_budgets():
    """(tile working-set budget, vmem_limit_bytes) from the local chip's VMEM."""
    cap = 64 * 1024 * 1024  # conservative fallback (v7x per-core VMEM)
    try:
        info = pltpu.get_tpu_info()
        cap = int(getattr(info, "vmem_capacity_bytes", cap))
    except Exception:
        pass
    budget = int(cap * 0.40)   # ~25 MiB on v7x, ~51 MiB on v5e/v6e
    limit = int(cap * 0.75)    # ~48 MiB on v7x, ~96 MiB on v5e/v6e
    return budget, limit


def _choose_tiles(B, S, E, x_item, m_item, o_item, budget):
    """Pick (TB, TS, TE) under the VMEM budget with layout-legal block dims:
       - TB multiple of 8 unless it equals B
       - TS multiple of 128 unless it equals S
       - TE multiple of 128 unless it equals E
    VMEM footprint model includes lane (128) / sublane padding and real dtypes.
    """
    sub_x = _sublane_multiple(x_item)

    def cost(tb, ts, te):
        xb = tb * _round_up(ts, sub_x) * _round_up(te, 128) * x_item
        mb = _round_up(tb, _sublane_multiple(m_item)) * _round_up(ts, 128) * m_item
        ob = _round_up(tb, _sublane_multiple(o_item)) * _round_up(te, 128) * o_item
        acc = _round_up(tb, 8) * _round_up(te, 128) * 4
        cnt = _round_up(tb, 8) * 128 * 4
        return 2 * (xb + mb + ob) + acc + cnt        # inputs/mask/out double-buffered

    tb0 = B if B <= 8 else 8
    ts0 = S if S <= 128 else 128

    # Embedding tile: full E if it fits at minimal TB/TS, else multiples of 128.
    if cost(tb0, ts0, E) <= budget:
        TE = E
    else:
        te = 128
        while te * 2 < E and cost(tb0, ts0, te * 2) <= budget:
            te *= 2
        TE = te

    # Sequence tile: full S if it fits, else lane-aligned multiples of 128
    # (ragged last tile handled in-kernel).
    if cost(tb0, S, TE) <= budget:
        TS = S
    else:
        ts = 128
        while ts * 2 < S and cost(tb0, ts * 2, TE) <= budget:
            ts *= 2
        TS = ts

    # Batch tile: multiples of 8 (or all of B when B <= 8).  Capped so the
    # batch grid axis keeps >= 2 steps whenever B > 8 -> both v7x TensorCores
    # (hence both bandwidth engines) are engaged; near-free on v5e/v6e.
    if B <= 8:
        TB = B
        # TODO(synk): B <= 8 leaves one v7x TensorCore idle (output sublane
        # tiling needs TB multiple of 8 or TB == B).
    else:
        tb_cap = max(8, (B // 2) // 8 * 8)
        tb = 8
        while tb * 2 <= tb_cap and cost(tb * 2, TS, TE) <= budget:
            tb *= 2
        TB = tb

    return TB, TS, TE


# ----------------------------------------------------------------------------
# Wrapper
# ----------------------------------------------------------------------------
def avg_encoder(inputs, input_mask, *, tile_override=None):
    """inputs: (B, S, E) float; input_mask: (B, S) {0,1} (any numeric/bool dtype)."""
    B, S, E = inputs.shape
    assert input_mask.shape == (B, S)

    mask = input_mask
    if mask.dtype.itemsize != 4:
        # 32-bit masks (f32/i32/u32) pass through natively; narrower/bool masks
        # would impose stricter sublane tiling on the (TB, TS) block.
        # TODO(synk): pass bool/int8/bf16 masks natively once TB is forced to
        # their sublane multiple; this cast only touches B*S*4 bytes.
        mask = mask.astype(jnp.float32)

    budget, vmem_limit = _vmem_budgets()
    if tile_override is not None:
        TB, TS, TE = tile_override
    else:
        TB, TS, TE = _choose_tiles(
            B, S, E,
            inputs.dtype.itemsize, mask.dtype.itemsize, inputs.dtype.itemsize,
            budget,
        )

    grid = (pl.cdiv(B, TB), pl.cdiv(E, TE), pl.cdiv(S, TS))
    kernel = _make_kernel(S, TS)

    out = pl.pallas_call(
        kernel,
        out_shape=jax.ShapeDtypeStruct((B, E), inputs.dtype),
        grid_spec=pltpu.PrefetchScalarGridSpec(
            num_scalar_prefetch=0,
            grid=grid,
            in_specs=[
                pl.BlockSpec((TB, TS, TE), lambda b, e, s: (b, s, e)),
                pl.BlockSpec((TB, TS), lambda b, e, s: (b, s)),
            ],
            # Output block reused across the sequence axis (accumulator-style),
            # written once as a lane-dense (TB, TE) slab.
            out_specs=pl.BlockSpec((TB, TE), lambda b, e, s: (b, e)),
            scratch_shapes=[
                pltpu.VMEM((TB, TE), jnp.float32),
                pltpu.VMEM((TB, 1), jnp.float32),
            ],
        ),
        compiler_params=pltpu.CompilerParams(
            dimension_semantics=("parallel", "parallel", "arbitrary"),
            vmem_limit_bytes=vmem_limit,
        ),
    )(inputs, mask)
    return out


# ----------------------------------------------------------------------------
# Reference + demo
# ----------------------------------------------------------------------------
def _reference(inputs, input_mask):
    m = input_mask.astype(jnp.float32)
    inputs_sum = jnp.sum(inputs.astype(jnp.float32) * m[..., None], axis=1)
    word_count = jnp.sum(m, axis=-1)
    word_count = jnp.where(word_count == 0, 1.0, word_count)[..., None]
    return (inputs_sum / word_count).astype(inputs.dtype)


if __name__ == "__main__":
    key = jax.random.PRNGKey(0)
    k1, k2, k3, k4, k5, k6 = jax.random.split(key, 6)

    # 1) Small shape consistent with the module (embedding_size = 32).
    B, S, E = 2, 8, 32
    inputs = jax.random.normal(k1, (B, S, E), dtype=jnp.float32)
    lengths = jnp.array([5, 3], dtype=jnp.int32)
    input_mask = (jnp.arange(S)[None, :] < lengths[:, None]).astype(jnp.float32)
    out = jax.block_until_ready(avg_encoder(inputs, input_mask))
    ref = _reference(inputs, input_mask)
    assert out.shape == (B, E)
    assert jnp.allclose(out, ref, atol=1e-5, rtol=1e-5), "mismatch vs reference"

    # 2) Ragged batch tiling (B=20 -> TB=8, partial final batch block, no padding).
    B2, S2, E2 = 20, 300, 128
    inputs2 = jax.random.normal(k2, (B2, S2, E2), dtype=jnp.float32)
    lengths2 = jax.random.randint(k3, (B2,), 0, S2 + 1)
    mask2 = (jnp.arange(S2)[None, :] < lengths2[:, None]).astype(jnp.float32)
    out2 = jax.block_until_ready(avg_encoder(inputs2, mask2))
    ref2 = _reference(inputs2, mask2)
    assert jnp.allclose(out2, ref2, atol=1e-4, rtol=1e-5), "mismatch (ragged batch)"

    # 3) Force ragged sequence tiles + E tiling to exercise in-kernel boundary
    #    masking and the 3rd grid axis (small shapes, tile_override only for test).
    B3, S3, E3 = 12, 300, 256
    inputs3 = jax.random.normal(k4, (B3, S3, E3), dtype=jnp.float32)
    lengths3 = jax.random.randint(k5, (B3,), 0, S3 + 1)
    mask3 = (jnp.arange(S3)[None, :] < lengths3[:, None]).astype(jnp.float32)
    out3 = jax.block_until_ready(avg_encoder(inputs3, mask3, tile_override=(8, 128, 128)))
    ref3 = _reference(inputs3, mask3)
    assert jnp.allclose(out3, ref3, atol=1e-4, rtol=1e-5), "mismatch (ragged S / E tiles)"

    print("KERNEL_OK")
</pallas_src>

<mosaic_0001>
module attributes {stable_mosaic.version = 11 : i64} {
  func.func @kernel(%arg0: i32, %arg1: i32, %arg2: i32, %arg3: memref<2x8x32xf32, #tpu.memory_space<vmem>>, %arg4: memref<2x8xf32, #tpu.memory_space<vmem>>, %arg5: memref<2x32xf32, #tpu.memory_space<vmem>>, %arg6: memref<2x32xf32, #tpu.memory_space<vmem>>, %arg7: memref<2x1xf32, #tpu.memory_space<vmem>>) attributes {dimension_semantics = [#tpu.dimension_semantics<parallel>, #tpu.dimension_semantics<parallel>, #tpu.dimension_semantics<arbitrary>], iteration_bounds = array<i64: 1, 1, 1>, scalar_prefetch = 0 : i64, scratch_operands = 2 : i64, tpu.core_type = #tpu.core_type<tc>, window_params = [{transform_indices = @transform_0, window_bounds = array<i64: 2, 8, 32>}, {transform_indices = @transform_1, window_bounds = array<i64: 2, 8>}, {transform_indices = @transform_2, window_bounds = array<i64: 2, 32>}]} {
    %c0_i32 = arith.constant 0 : i32
    %0 = arith.cmpi eq, %arg2, %c0_i32 : i32
    %1 = arith.extui %0 : i1 to i32
    %c0_i32_0 = arith.constant 0 : i32
    %2 = arith.cmpi ne, %1, %c0_i32_0 : i32
    scf.if %2 {
      %cst_16 = arith.constant 0.000000e+00 : f32
      %20 = vector.broadcast %cst_16 : f32 to vector<2x32xf32>
      %c0_17 = arith.constant 0 : index
      %c0_18 = arith.constant 0 : index
      %21 = vector.load %arg6[%c0_17, %c0_18] : memref<2x32xf32, #tpu.memory_space<vmem>>, vector<2x32xf32>
      tpu.vector_store %arg6[%c0_17, %c0_18], %20 {strides = array<i32>} : memref<2x32xf32, #tpu.memory_space<vmem>>, vector<2x32xf32>,
      %cst_19 = arith.constant 0.000000e+00 : f32
      %22 = vector.broadcast %cst_19 : f32 to vector<2x1xf32>
      %c0_20 = arith.constant 0 : index
      %c0_21 = arith.constant 0 : index
      %23 = vector.load %arg7[%c0_20, %c0_21] : memref<2x1xf32, #tpu.memory_space<vmem>>, vector<2x1xf32>
      tpu.vector_store %arg7[%c0_20, %c0_21], %22 {strides = array<i32>} : memref<2x1xf32, #tpu.memory_space<vmem>>, vector<2x1xf32>,
    } else {
    }
    %c0 = arith.constant 0 : index
    %c0_1 = arith.constant 0 : index
    %c0_2 = arith.constant 0 : index
    %3 = vector.load %arg3[%c0, %c0_1, %c0_2] : memref<2x8x32xf32, #tpu.memory_space<vmem>>, vector<2x8x32xf32>
    %c0_3 = arith.constant 0 : index
    %c0_4 = arith.constant 0 : index
    %4 = vector.load %arg4[%c0_3, %c0_4] : memref<2x8xf32, #tpu.memory_space<vmem>>, vector<2x8xf32>
    %c0_5 = arith.constant 0 : index
    %c0_6 = arith.constant 0 : index
    %5 = vector.load %arg6[%c0_5, %c0_6] : memref<2x32xf32, #tpu.memory_space<vmem>>, vector<2x32xf32>
    %6 = vector.shape_cast %4 : vector<2x8xf32> to vector<2x8x1xf32>
    %7 = vector.broadcast %6 : vector<2x8x1xf32> to vector<2x8x32xf32>
    %8 = arith.mulf %3, %7 : vector<2x8x32xf32>
    %cst = arith.constant dense<0.000000e+00> : vector<2x32xf32>
    %9 = vector.multi_reduction <add>, %8, %cst [1] : vector<2x8x32xf32> to vector<2x32xf32>
    %10 = arith.addf %5, %9 : vector<2x32xf32>
    %c0_7 = arith.constant 0 : index
    %c0_8 = arith.constant 0 : index
    %11 = vector.load %arg6[%c0_7, %c0_8] : memref<2x32xf32, #tpu.memory_space<vmem>>, vector<2x32xf32>
    tpu.vector_store %arg6[%c0_7, %c0_8], %10 {strides = array<i32>} : memref<2x32xf32, #tpu.memory_space<vmem>>, vector<2x32xf32>,
    %c0_9 = arith.constant 0 : index
    %c0_10 = arith.constant 0 : index
    %12 = vector.load %arg7[%c0_9, %c0_10] : memref<2x1xf32, #tpu.memory_space<vmem>>, vector<2x1xf32>
    %cst_11 = arith.constant dense<0.000000e+00> : vector<2xf32>
    %13 = vector.multi_reduction <add>, %4, %cst_11 [1] : vector<2x8xf32> to vector<2xf32>
    %14 = vector.shape_cast %13 : vector<2xf32> to vector<2x1xf32>
    %15 = arith.addf %12, %14 : vector<2x1xf32>
    %c0_12 = arith.constant 0 : index
    %c0_13 = arith.constant 0 : index
    %16 = vector.load %arg7[%c0_12, %c0_13] : memref<2x1xf32, #tpu.memory_space<vmem>>, vector<2x1xf32>
    tpu.vector_store %arg7[%c0_12, %c0_13], %15 {strides = array<i32>} : memref<2x1xf32, #tpu.memory_space<vmem>>, vector<2x1xf32>,
    %c0_i32_14 = arith.constant 0 : i32
    %17 = arith.cmpi eq, %arg2, %c0_i32_14 : i32
    %18 = arith.extui %17 : i1 to i32
    %c0_i32_15 = arith.constant 0 : i32
    %19 = arith.cmpi ne, %18, %c0_i32_15 : i32
    scf.if %19 {
      %c0_16 = arith.constant 0 : index
      %c0_17 = arith.constant 0 : index
      %20 = vector.load %arg7[%c0_16, %c0_17] : memref<2x1xf32, #tpu.memory_space<vmem>>, vector<2x1xf32>
      %cst_18 = arith.constant 0.000000e+00 : f32
      %21 = vector.broadcast %cst_18 : f32 to vector<2x1xf32>
      %22 = arith.cmpf oeq, %20, %21 : vector<2x1xf32>
      %cst_19 = arith.constant 1.000000e+00 : f32
      %23 = vector.broadcast %cst_19 : f32 to vector<2x1xf32>
      %24 = arith.select %22, %23, %20 : vector<2x1xi1>, vector<2x1xf32>
      %25 = tpu.reciprocal %24 : vector<2x1xf32> -> vector<2x1xf32>
      %c0_20 = arith.constant 0 : index
      %c0_21 = arith.constant 0 : index
      %26 = vector.load %arg6[%c0_20, %c0_21] : memref<2x32xf32, #tpu.memory_space<vmem>>, vector<2x32xf32>
      %27 = vector.broadcast %25 : vector<2x1xf32> to vector<2x32xf32>
      %28 = arith.mulf %26, %27 : vector<2x32xf32>
      %c0_22 = arith.constant 0 : index
      %c0_23 = arith.constant 0 : index
      %29 = vector.load %arg5[%c0_22, %c0_23] : memref<2x32xf32, #tpu.memory_space<vmem>>, vector<2x32xf32>
      tpu.vector_store %arg5[%c0_22, %c0_23], %28 {strides = array<i32>} : memref<2x32xf32, #tpu.memory_space<vmem>>, vector<2x32xf32>,
    } else {
    }
    return
  }
  func.func @transform_0(%arg0: i32, %arg1: i32, %arg2: i32) -> (i32, i32, i32) {
    %c0_i32 = arith.constant 0 : i32
    return %arg0, %arg2, %arg1 : i32, i32, i32
  }
  func.func @transform_1(%arg0: i32, %arg1: i32, %arg2: i32) -> (i32, i32) {
    %c0_i32 = arith.constant 0 : i32
    return %arg0, %arg2 : i32, i32
  }
  func.func @transform_2(%arg0: i32, %arg1: i32, %arg2: i32) -> (i32, i32) {
    %c0_i32 = arith.constant 0 : i32
    return %arg0, %arg1 : i32, i32
  }
}

</mosaic_0001>

<llo_original>
// kernel: tpu_custom_call.1
$region0: #{tpu_custom_call.1}
  #allocation0 [shape = 'u32[]', space=smem, size = 0x4, offset = 0x4, fixed_abs, tag = 'smem constant byte address 0x4 - core index']
  #allocation1 [shape = 'u32[72,128]{1,0:T(1,128)}', space=vmem, size = 0x9000, scoped, tag = 'internal scratch']
  #allocation2 [shape = 'f32[2,32]{1,0:T(2,128)}', space=vmem, size = 0x400, scoped, tag = 'scratch operand']
  #allocation3 [shape = 'f32[2,1]{1,0:T(2,128)}', space=vmem, size = 0x400, scoped, tag = 'scratch operand']
  %s0 = inlined_call_operand.hbm [shape: f32[2,8,32], index: 0, kind: input, shape index: {}]
  %s1 = inlined_call_operand.hbm [shape: f32[2,8], index: 1, kind: input, shape index: {}]
  %s2 = inlined_call_operand.hbm [shape: f32[2,32], index: 2, kind: output, shape index: {}]
  %s3 = sld [smem:[#allocation0]]
  $region34: #{tpu_custom_call.1} parent=0
    _
  %s5 = ssub.s32 1, %s3
  %s6 = scalar_select 0, %s5, %s3
  $region1: #{tpu_custom_call.1} parent=0
    #allocation4 [shape = 'u8[8192]{0}', space=vmem, size = 0x2000, scoped, tag = 'input window, operand 0, single buffered']
    #allocation5 [shape = 's32[1]{0}', space=sflag, size = 0x4, scoped, tag = 'scoped memory for tpu_custom_call.1']
    #allocation6 [shape = 's32[1]{0}', space=sflag, size = 0x4, scoped, tag = 'scoped memory for tpu_custom_call.1']
    #allocation7 [shape = 'u8[1024]{0}', space=vmem, size = 0x400, scoped, tag = 'input window, operand 1, single buffered']
    #allocation8 [shape = 's32[1]{0}', space=sflag, size = 0x4, scoped, tag = 'scoped memory for tpu_custom_call.1']
    #allocation9 [shape = 'u8[1024]{0}', space=vmem, size = 0x400, scoped, tag = 'output window, operand 0, single buffered']
    %7 = vsyncpa [#allocation5], 0
    %8 = vsyncpa [#allocation8], 0
    %9 = vsyncpa [#allocation6], 0
    // Predicated region
    $region2: #{tpu_custom_call.1} parent=1 // pred_check
      _
    $region3: #{tpu_custom_call.1} parent=1 // pred_check_branch
      %11 = sbr.rel (0) target = $region5
    $region4: #{tpu_custom_call.1} parent=1 // pred_region
      %13 = vsyncadd [#allocation5], 0
      %s14 = sshll.u32 %s0, 4
      %s15 = int_to_ptr.hbm [resolvable:$true] %s14
      %s16 = sshll.u32 [#allocation4], 4
      %s17 = int_to_ptr.vmem [resolvable:$true] %s16
      %22 = dma.hbm_to_vmem [thread:$0]  %s15, 256, %s17, [#allocation5], 128, 128, 8
    $region5: #{tpu_custom_call.1} parent=1 // pred_fallthru
      _
    // Predicated region
    $region6: #{tpu_custom_call.1} parent=1 // pred_check
      _
    $region7: #{tpu_custom_call.1} parent=1 // pred_check_branch
      %24 = sbr.rel (0) target = $region9
    $region8: #{tpu_custom_call.1} parent=1 // pred_region
      %26 = vsyncadd [#allocation8], 0
      %s28 = sshll.u32 %s1, 4
      %s29 = int_to_ptr.hbm [resolvable:$true] %s28
      %s30 = sshll.u32 [#allocation7], 4
      %s31 = int_to_ptr.vmem [resolvable:$true] %s30
      %33 = dma.hbm_to_vmem [thread:$0]  %s29, 32, %s31, [#allocation8]
    $region9: #{tpu_custom_call.1} parent=1 // pred_fallthru
      _
    // Predicated region
    $region10: #{tpu_custom_call.1} parent=1 // pred_check
      _
    $region11: #{tpu_custom_call.1} parent=1 // pred_check_branch
      %35 = sbr.rel (0) target = $region13
    $region12: #{tpu_custom_call.1} parent=1 // pred_region
      %37 = dma.done [#allocation5], 256
    $region13: #{tpu_custom_call.1} parent=1 // pred_fallthru
      _
    // Predicated region
    $region14: #{tpu_custom_call.1} parent=1 // pred_check
      _
    $region15: #{tpu_custom_call.1} parent=1 // pred_check_branch
      %39 = sbr.rel (0) target = $region17
    $region16: #{tpu_custom_call.1} parent=1 // pred_region
      %41 = dma.done [#allocation8], 32
    $region17: #{tpu_custom_call.1} parent=1 // pred_fallthru
      _
    %p42 = scmp.eq.s32.totalorder 0, 0
    // Predicated region
    $region18: #{tpu_custom_call.1} parent=1 // pred_check
      %p43 = pneg %p42
    $region19: #{tpu_custom_call.1} parent=1 // pred_check_branch
      %45 = sbr.rel (%p43) target = $region21
    $region20: #{tpu_custom_call.1} parent=1 // pred_region
      %vm46 = vcmask 254976
      %47 = vst.msk [vmem:[#allocation2] sm:$0x3] %vm46, 0.0
      %vm48 = vcmask 1024
      %49 = vst.msk [vmem:[#allocation3] sm:$0x3] %vm48, 0.0
    $region21: #{tpu_custom_call.1} parent=1 // pred_fallthru
      _
    %v50 = vld [vmem:[#allocation4] sm:$0xff]
    %v51 = vld [vmem:[#allocation4 + $0x8] sm:$0xff]
    %v52 = vld [vmem:[#allocation7] sm:$0x3]
    %v53 = vld [vmem:[#allocation2] sm:$0x3]
    %v54 = vperm.slane %v52, 0
    %v55 = vlaneseq
    %v56 = vshrl.u32 %v55, 7
    %58 = vset.pattern.permute.xlu0 %v56
    %59 = vperm.xlu0 %58, %v54
    %v60 = vpop.permute.xlu0 %59
    %v61 = vperm.slane %v52, 1
    %v62 = vlaneseq
    %v63 = vshrl.u32 %v62, 7
    %65 = vset.pattern.permute.xlu0 %v63
    %66 = vperm.xlu0 %65, %v61
    %v67 = vpop.permute.xlu0 %66
    %v68 = vmul.f32 %v50, %v60
    %v69 = vmul.f32 %v51, %v67
    %vm70 = vcmask 261120
    %v71 = vsel %vm70, %v68, 0.0
    %v72 = vrot.slane %v71, 4
    %v73 = vadd.f32 %v71, %v72
    %v74 = vrot.slane %v73, 2
    %v75 = vadd.f32 %v73, %v74
    %v76 = vrot.slane %v75, 1
    %v77 = vadd.f32 %v75, %v76
    %v78 = vsel %vm70, %v69, 0.0
    %v79 = vrot.slane %v78, 4
    %v80 = vadd.f32 %v78, %v79
    %v81 = vrot.slane %v80, 2
    %v82 = vadd.f32 %v80, %v81
    %v83 = vrot.slane %v82, 1
    %v84 = vadd.f32 %v82, %v83
    %vm87 = vcmask 1041409
    %v88 = vsel %vm87, %v84, %v77
    %v90 = vadd.f32 %v53, %v88
    %vm91 = vcmask 254976
    %92 = vst.msk [vmem:[#allocation2] sm:$0x3] %vm91, %v90
    %v93 = vld [vmem:[#allocation3] sm:$0x3]
    %vm94 = vcmask 58368
    %v95 = vsel %vm94, %v52, 0.0
    %96 = vadd.xlane.f32.xlu0 %v95
    %v97 = vpop.xlane.xlu0 %96
    %v98 = vadd.f32 %v93, %v97
    %vm99 = vcmask 1024
    %100 = vst.msk [vmem:[#allocation3] sm:$0x3] %vm99, %v98
    // Predicated region
    $region22: #{tpu_custom_call.1} parent=1 // pred_check
      %p101 = pneg %p42
    $region23: #{tpu_custom_call.1} parent=1 // pred_check_branch
      %103 = sbr.rel (%p101) target = $region25
    $region24: #{tpu_custom_call.1} parent=1 // pred_region
      %v104 = vld [vmem:[#allocation3] sm:$0x3]
      %vm105 = vcmp.eq.f32.partialorder %v104, 0.0
      %v106 = vsel %vm105, 1.0, %v104
      %v107 = vrcp.pop %v106
      %v108 = vmul.f32 %v106, %v107
      %v109 = vsub.f32 1.0, %v108
      %v110 = vmul.f32 %v107, %v109
      %v111 = vadd.f32 %v107, %v110
      %vm112 = vweird.f32 %v106
      %vm113 = vweird.f32 %v107
      %vm114 = vmor %vm112, %vm113
      %v115 = vsel %vm114, %v107, %v111
      %v116 = vand.u32 2147483647, %v106
      %vm117 = vcmp.eq.f32.partialorder %v116, 8.507059e+37
      %v118 = vand.u32 %v106, 2147483648
      %v119 = vor.u32 1.1754944e-38, %v118
      %v120 = vsel %vm117, %v119, %v115
      %v121 = vld [vmem:[#allocation2] sm:$0x3]
      %123 = vset.pattern.permute.xlu0 0
      %124 = vperm.xlu0 %123, %v120
      %v125 = vpop.permute.xlu0 %124
      %v127 = vmul.f32 %v121, %v125
      %128 = vst.msk [vmem:[#allocation9] sm:$0x3] %vm91, %v127
    $region25: #{tpu_custom_call.1} parent=1 // pred_fallthru
      _
    // Predicated region
    $region26: #{tpu_custom_call.1} parent=1 // pred_check
      _
    $region27: #{tpu_custom_call.1} parent=1 // pred_check_branch
      %130 = sbr.rel (0) target = $region29
    $region28: #{tpu_custom_call.1} parent=1 // pred_region
      %132 = vsyncadd [#allocation6], 0
      %s134 = sshll.u32 [#allocation9], 4
      %s135 = int_to_ptr.vmem [resolvable:$true] %s134
      %s136 = sshll.u32 %s2, 4
      %s137 = int_to_ptr.hbm [resolvable:$true] %s136
      %139 = dma.vmem_to_hbm [thread:$0]  %s135, 32, %s137, [#allocation6]
    $region29: #{tpu_custom_call.1} parent=1 // pred_fallthru
      _
    // Predicated region
    $region30: #{tpu_custom_call.1} parent=1 // pred_check
      _
    $region31: #{tpu_custom_call.1} parent=1 // pred_check_branch
      %141 = sbr.rel (0) target = $region33
    $region32: #{tpu_custom_call.1} parent=1 // pred_region
      %143 = dma.done [#allocation6], 32
    $region33: #{tpu_custom_call.1} parent=1 // pred_fallthru
      _
    %144 = vsyncpa [#allocation5], 1
    %145 = vsyncpa [#allocation8], 1
    %146 = vsyncpa [#allocation6], 1

</llo_original>
